<compile_context>
chip_gen: v7x
topology: tpu7x:2x2x1
jax: 0.10.0
libtpu: 0.0.40
codegen_flags: <defaults>
</compile_context>

<pallas_src>
import jax
import jax.numpy as jnp
from jax.experimental import pallas as pl
from jax.experimental.pallas import tpu as pltpu


# ----------------------------- GELU (exact, erf) -----------------------------

_SQRT_HALF = 0.7071067811865476


def _erf_approx(x):
    """Abramowitz & Stegun 7.1.26 erf (max abs err 1.5e-7), divide-free."""
    a1, a2, a3, a4, a5 = (0.254829592, -0.284496736, 1.421413741,
                          -1.453152027, 1.061405429)
    p = 0.3275911
    ax = jnp.abs(x)
    d = 1.0 + p * ax
    t0 = pl.reciprocal(d, approx=True)      # EUP slot (nearly free)
    t = t0 * (2.0 - d * t0)                 # one NR step -> ~f32 accuracy
    poly = ((((a5 * t + a4) * t + a3) * t + a2) * t + a1) * t
    y = 1.0 - poly * jnp.exp(-ax * ax)      # exp -> EUP slot
    return jnp.where(x >= 0, y, -y)


def _gelu_exact(x):
    """0.5 * x * (1 + erf(x / sqrt(2))) — matches PyTorch nn.GELU() default."""
    return 0.5 * x * (1.0 + _erf_approx(x * _SQRT_HALF))


# --------------------------------- kernels ------------------------------------

def _mlp_kernel_resident(x_ref, w1_ref, b1_ref, w2_ref, b2_ref, o_ref):
    """Weights fully VMEM-resident; one grid step = one row tile."""
    h = jnp.dot(x_ref[...], w1_ref[...], preferred_element_type=jnp.float32)
    h = h + b1_ref[...].astype(jnp.float32)
    h = _gelu_exact(h)
    h = h.astype(w2_ref.dtype)
    out = jnp.dot(h, w2_ref[...], preferred_element_type=jnp.float32)
    out = out + b2_ref[...].astype(jnp.float32)
    o_ref[...] = out.astype(o_ref.dtype)


def _mlp_kernel_htiled(x_ref, w1_ref, b1_ref, w2_ref, b2_ref, o_ref, acc_ref):
    """Hidden dim streamed in chunks; fc2 accumulated in f32 VMEM scratch."""
    hi = pl.program_id(1)

    @pl.when(hi == 0)
    def _():
        acc_ref[...] = jnp.zeros_like(acc_ref)

    h = jnp.dot(x_ref[...], w1_ref[...], preferred_element_type=jnp.float32)
    h = h + b1_ref[...].astype(jnp.float32)
    h = _gelu_exact(h)
    h = h.astype(w2_ref.dtype)
    acc_ref[...] += jnp.dot(h, w2_ref[...], preferred_element_type=jnp.float32)

    @pl.when(hi == pl.num_programs(1) - 1)
    def _():
        o_ref[...] = (acc_ref[...]
                      + b2_ref[...].astype(jnp.float32)).astype(o_ref.dtype)


# -------------------------------- helpers -------------------------------------

def _round_up(v: int, m: int) -> int:
    return (v + m - 1) // m * m


def _device_kind() -> str:
    try:
        return jax.devices()[0].device_kind.lower()
    except Exception:
        return ""


def _vmem_capacity_bytes() -> int:
    try:
        info = pltpu.get_tpu_info()
        for attr in ("vmem_capacity_bytes", "vmem_bytes", "vmem_size_bytes"):
            v = getattr(info, attr, None)
            if v:
                return int(v)
    except Exception:
        pass
    kind = _device_kind()
    if "v7" in kind:
        return 64 << 20
    if "v4" in kind or "v5" in kind or "v6" in kind:
        return 128 << 20
    return 64 << 20   # conservative default


def _num_tensorcores() -> int:
    try:
        info = pltpu.get_tpu_info()
        for attr in ("num_cores", "tensorcore_count", "num_tensorcores"):
            v = getattr(info, attr, None)
            if v:
                return int(v)
    except Exception:
        pass
    return 2 if "v7" in _device_kind() else 1


# -------------------------------- wrapper -------------------------------------

def mlp_pallas(x, w1, b1, w2, b2):
    """Mlp forward (dropout p=0).

    x  : (..., Cin)
    w1 : (Cin, H)   -- fc1 weight transposed to (in, out)
    b1 : (H,)
    w2 : (H, Cout)  -- fc2 weight transposed to (in, out)
    b2 : (Cout,)
    """
    *lead, cin = x.shape
    hid = w1.shape[1]
    cout = w2.shape[1]
    out_dtype = x.dtype

    x2 = x.reshape(-1, cin)
    m = x2.shape[0]

    xsize = jnp.dtype(x.dtype).itemsize
    wsize = jnp.dtype(w1.dtype).itemsize

    # Lane-dense output: pad Cout to a multiple of 128 so output stores are
    # unmasked vst's (no-op for typical transformer dims).
    cout_p = cout if cout % 128 == 0 else _round_up(cout, 128)
    if cout_p != cout:
        w2 = jnp.pad(w2, ((0, 0), (0, cout_p - cout)))
        b2 = jnp.pad(b2, ((0, cout_p - cout),))

    # ---------------- VMEM budgeting / tile selection ----------------
    vmem_cap = _vmem_capacity_bytes()
    budget = int(vmem_cap * 0.6)                      # headroom for Mosaic scratch
    tm_target = 512 if vmem_cap >= (128 << 20) else 256

    def fixed_bytes(th, n_bufs):
        # weight / bias blocks ((1, n) biases pad to 8 sublanes in VMEM)
        return n_bufs * (cin * th + th * cout_p + 8 * th) * wsize + 8 * cout_p * wsize

    def per_row_bytes(th):
        # x tile (2 bufs) + out tile (2 bufs) + f32 acc + f32 hidden intermediate
        return 2 * cin * xsize + 2 * cout_p * xsize + 4 * cout_p + 12 * th

    min_rows = max(8, min(m, 128))

    hid_p = hid
    if fixed_bytes(hid, 1) + min_rows * per_row_bytes(hid) <= budget:
        th, n_h = hid, 1                               # weights fully resident
    else:
        # H-tiled path: pad H to a multiple of 128 with zero columns/rows
        # (exact: GELU(0) == 0, zero W2 rows contribute nothing).
        hid_p = _round_up(hid, 128)
        if hid_p != hid:
            w1 = jnp.pad(w1, ((0, 0), (0, hid_p - hid)))
            b1 = jnp.pad(b1, ((0, hid_p - hid),))
            w2 = jnp.pad(w2, ((0, hid_p - hid), (0, 0)))
        th = 128
        for cand in range(hid_p, 127, -128):
            if hid_p % cand == 0 and (
                    fixed_bytes(cand, 2) + min_rows * per_row_bytes(cand)) <= budget:
                th = cand
                break
        n_h = hid_p // th

    n_weight_bufs = 1 if n_h == 1 else 2
    avail = budget - fixed_bytes(th, n_weight_bufs)
    if m < 8:
        tm = m
    else:
        tm = min(tm_target, (m // 8) * 8)
        tm_fit = (max(avail, 0) // per_row_bytes(th) // 8) * 8
        if tm_fit >= 8:
            tm = min(tm, tm_fit)
        tm = max(tm, 8)
        # Split tiny problems only where it buys parallelism (2-TC chips).
        if _num_tensorcores() >= 2 and 16 <= m <= tm:
            tm = max(8, _round_up((m + 1) // 2, 8))

    n_rows = pl.cdiv(m, tm)          # ragged last row-block: masked load/store

    need = fixed_bytes(th, n_weight_bufs) + tm * per_row_bytes(th)
    vmem_limit = int(min(vmem_cap, max(need * 3 // 2 + (4 << 20), 32 << 20)))

    b1_2 = b1.reshape(1, hid_p)
    b2_2 = b2.reshape(1, cout_p)

    cost = pl.CostEstimate(
        flops=int(2 * m * (cin * hid + hid * cout)),
        transcendentals=int(2 * m * hid),             # exp + reciprocal per element
        bytes_accessed=int(x2.size * xsize + m * cout_p * xsize
                           + (w1.size + b1_2.size + w2.size + b2_2.size) * wsize),
    )

    def _run(single_buffer_weights):
        def wspec(shape, index_map):
            # Constant-index-map operands: single-buffer to halve weight VMEM.
            if single_buffer_weights:
                try:
                    return pl.BlockSpec(shape, index_map,
                                        pipeline_mode=pl.Buffered(1))
                except TypeError:
                    pass
            return pl.BlockSpec(shape, index_map)

        if n_h == 1:
            grid = (n_rows,)
            in_specs = [
                pl.BlockSpec((tm, cin), lambda i: (i, 0)),          # x row tile
                wspec((cin, hid_p), lambda i: (0, 0)),              # fc1 W (resident)
                wspec((1, hid_p), lambda i: (0, 0)),                # fc1 b
                wspec((hid_p, cout_p), lambda i: (0, 0)),           # fc2 W (resident)
                wspec((1, cout_p), lambda i: (0, 0)),               # fc2 b
            ]
            out_specs = pl.BlockSpec((tm, cout_p), lambda i: (i, 0))
            scratch = []
            kernel = _mlp_kernel_resident
            dim_sem = ("parallel",)
        else:
            grid = (n_rows, n_h)
            in_specs = [
                pl.BlockSpec((tm, cin), lambda i, h: (i, 0)),       # x (revisited)
                pl.BlockSpec((cin, th), lambda i, h: (0, h)),       # fc1 W chunk
                pl.BlockSpec((1, th), lambda i, h: (0, h)),         # fc1 b chunk
                pl.BlockSpec((th, cout_p), lambda i, h: (h, 0)),    # fc2 W chunk
                wspec((1, cout_p), lambda i, h: (0, 0)),            # fc2 b
            ]
            out_specs = pl.BlockSpec((tm, cout_p), lambda i, h: (i, 0))
            scratch = [pltpu.VMEM((tm, cout_p), jnp.float32)]
            kernel = _mlp_kernel_htiled
            dim_sem = ("parallel", "arbitrary")

        return pl.pallas_call(
            kernel,
            out_shape=jax.ShapeDtypeStruct((m, cout_p), out_dtype),
            grid_spec=pltpu.PrefetchScalarGridSpec(
                num_scalar_prefetch=0,
                grid=grid,
                in_specs=in_specs,
                out_specs=out_specs,
                scratch_shapes=scratch),
            compiler_params=pltpu.CompilerParams(
                dimension_semantics=dim_sem,
                vmem_limit_bytes=vmem_limit),
            cost_estimate=cost,
        )(x2, w1, b1_2, w2, b2_2)

    try:
        out = _run(single_buffer_weights=True)
    except Exception:
        # Fallback: default double-buffered weight blocks (VMEM cost only).
        out = _run(single_buffer_weights=False)

    if cout_p != cout:
        out = out[:, :cout]
    return out.reshape(*lead, cout)


# ------------------------------- reference ------------------------------------

def mlp_ref(x, w1, b1, w2, b2):
    """Pure-JAX reference mirroring the PyTorch forward (dropout p=0)."""
    h = x @ w1 + b1
    h = jax.nn.gelu(h, approximate=False)   # exact erf GELU == nn.GELU() default
    return h @ w2 + b2


# ---------------------------------- test --------------------------------------

if __name__ == "__main__":
    B, N = 2, 8
    in_features, hidden_features, out_features = 32, 128, 32

    key = jax.random.PRNGKey(0)
    kx, k1, kb1, k2, kb2 = jax.random.split(key, 5)

    x = jax.random.normal(kx, (B, N, in_features), dtype=jnp.float32)

    # nn.Linear stores weight as (out, in); pass transposed (in, out) so the
    # kernel computes plain `x @ W`.
    w1 = jax.random.normal(k1, (in_features, hidden_features),
                           dtype=jnp.float32) * (1.0 / jnp.sqrt(in_features))
    b1 = jax.random.normal(kb1, (hidden_features,), dtype=jnp.float32) * 0.02
    w2 = jax.random.normal(k2, (hidden_features, out_features),
                           dtype=jnp.float32) * (1.0 / jnp.sqrt(hidden_features))
    b2 = jax.random.normal(kb2, (out_features,), dtype=jnp.float32) * 0.02

    out = jax.block_until_ready(mlp_pallas(x, w1, b1, w2, b2))
    ref = mlp_ref(x, w1, b1, w2, b2)

    assert out.shape == (B, N, out_features)
    assert jnp.allclose(out, ref, atol=1e-4, rtol=1e-4), (
        "mismatch vs reference, max abs err = "
        + str(float(jnp.max(jnp.abs(out - ref)))))

    print("KERNEL_OK")
</pallas_src>

<mosaic_0001>
module attributes {stable_mosaic.version = 11 : i64} {
  func.func @_mlp_kernel_resident(%arg0: i32, %arg1: memref<16x32xf32, #tpu.memory_space<vmem>>, %arg2: memref<32x128xf32, #tpu.memory_space<vmem>>, %arg3: memref<1x128xf32, #tpu.memory_space<vmem>>, %arg4: memref<128x128xf32, #tpu.memory_space<vmem>>, %arg5: memref<1x128xf32, #tpu.memory_space<vmem>>, %arg6: memref<16x128xf32, #tpu.memory_space<vmem>>) attributes {dimension_semantics = [#tpu.dimension_semantics<parallel>], iteration_bounds = array<i64: 1>, scalar_prefetch = 0 : i64, scratch_operands = 0 : i64, tpu.core_type = #tpu.core_type<tc>, window_params = [{transform_indices = @transform_0, window_bounds = array<i64: 16, 32>}, {pipeline_mode = #tpu.pipeline_mode<synchronous>, transform_indices = @transform_1, window_bounds = array<i64: 32, 128>}, {pipeline_mode = #tpu.pipeline_mode<synchronous>, transform_indices = @transform_2, window_bounds = array<i64: 1, 128>}, {pipeline_mode = #tpu.pipeline_mode<synchronous>, transform_indices = @transform_3, window_bounds = array<i64: 128, 128>}, {pipeline_mode = #tpu.pipeline_mode<synchronous>, transform_indices = @transform_4, window_bounds = array<i64: 1, 128>}, {transform_indices = @transform_5, window_bounds = array<i64: 16, 128>}]} {
    %c0 = arith.constant 0 : index
    %c0_0 = arith.constant 0 : index
    %0 = vector.load %arg1[%c0, %c0_0] : memref<16x32xf32, #tpu.memory_space<vmem>>, vector<16x32xf32>
    %c0_1 = arith.constant 0 : index
    %c0_2 = arith.constant 0 : index
    %1 = vector.load %arg2[%c0_1, %c0_2] : memref<32x128xf32, #tpu.memory_space<vmem>>, vector<32x128xf32>
    %cst = arith.constant dense<0.000000e+00> : vector<16x128xf32>
    %2 = tpu.matmul %0, %1, %cst {dimension_numbers = #tpu.dot_dimension_numbers<[1], [0], [0], [1], [0, 0, 1, 1], [], []>} : vector<16x32xf32>, vector<32x128xf32>, vector<16x128xf32> -> vector<16x128xf32>
    %c0_3 = arith.constant 0 : index
    %c0_4 = arith.constant 0 : index
    %3 = vector.load %arg3[%c0_3, %c0_4] : memref<1x128xf32, #tpu.memory_space<vmem>>, vector<1x128xf32>
    %4 = vector.broadcast %3 : vector<1x128xf32> to vector<16x128xf32>
    %5 = arith.addf %2, %4 : vector<16x128xf32>
    %cst_5 = arith.constant 5.000000e-01 : f32
    %6 = vector.broadcast %cst_5 : f32 to vector<16x128xf32>
    %7 = arith.mulf %6, %5 : vector<16x128xf32>
    %cst_6 = arith.constant 0.707106769 : f32
    %8 = vector.broadcast %cst_6 : f32 to vector<16x128xf32>
    %9 = arith.mulf %5, %8 : vector<16x128xf32>
    %10 = math.absf %9 : vector<16x128xf32>
    %cst_7 = arith.constant 0.327591091 : f32
    %11 = vector.broadcast %cst_7 : f32 to vector<16x128xf32>
    %12 = arith.mulf %11, %10 : vector<16x128xf32>
    %cst_8 = arith.constant 1.000000e+00 : f32
    %13 = vector.broadcast %cst_8 : f32 to vector<16x128xf32>
    %14 = arith.addf %13, %12 : vector<16x128xf32>
    %15 = tpu.reciprocal %14 {approx = true} : vector<16x128xf32> -> vector<16x128xf32>
    %16 = arith.mulf %14, %15 : vector<16x128xf32>
    %cst_9 = arith.constant 2.000000e+00 : f32
    %17 = vector.broadcast %cst_9 : f32 to vector<16x128xf32>
    %18 = arith.subf %17, %16 : vector<16x128xf32>
    %19 = arith.mulf %15, %18 : vector<16x128xf32>
    %cst_10 = arith.constant 1.06140542 : f32
    %20 = vector.broadcast %cst_10 : f32 to vector<16x128xf32>
    %21 = arith.mulf %20, %19 : vector<16x128xf32>
    %cst_11 = arith.constant -1.45315206 : f32
    %22 = vector.broadcast %cst_11 : f32 to vector<16x128xf32>
    %23 = arith.addf %21, %22 : vector<16x128xf32>
    %24 = arith.mulf %23, %19 : vector<16x128xf32>
    %cst_12 = arith.constant 1.42141378 : f32
    %25 = vector.broadcast %cst_12 : f32 to vector<16x128xf32>
    %26 = arith.addf %24, %25 : vector<16x128xf32>
    %27 = arith.mulf %26, %19 : vector<16x128xf32>
    %cst_13 = arith.constant -0.284496725 : f32
    %28 = vector.broadcast %cst_13 : f32 to vector<16x128xf32>
    %29 = arith.addf %27, %28 : vector<16x128xf32>
    %30 = arith.mulf %29, %19 : vector<16x128xf32>
    %cst_14 = arith.constant 0.254829586 : f32
    %31 = vector.broadcast %cst_14 : f32 to vector<16x128xf32>
    %32 = arith.addf %30, %31 : vector<16x128xf32>
    %33 = arith.mulf %32, %19 : vector<16x128xf32>
    %cst_15 = arith.constant 0.000000e+00 : f32
    %34 = vector.broadcast %cst_15 : f32 to vector<16x128xf32>
    %35 = arith.subf %34, %10 : vector<16x128xf32>
    %36 = arith.mulf %35, %10 : vector<16x128xf32>
    %37 = math.exp %36 : vector<16x128xf32>
    %38 = arith.mulf %33, %37 : vector<16x128xf32>
    %cst_16 = arith.constant 1.000000e+00 : f32
    %39 = vector.broadcast %cst_16 : f32 to vector<16x128xf32>
    %40 = arith.subf %39, %38 : vector<16x128xf32>
    %cst_17 = arith.constant 0.000000e+00 : f32
    %41 = vector.broadcast %cst_17 : f32 to vector<16x128xf32>
    %42 = arith.cmpf oge, %9, %41 : vector<16x128xf32>
    %cst_18 = arith.constant 0.000000e+00 : f32
    %43 = vector.broadcast %cst_18 : f32 to vector<16x128xf32>
    %44 = arith.subf %43, %40 : vector<16x128xf32>
    %45 = arith.select %42, %40, %44 : vector<16x128xi1>, vector<16x128xf32>
    %cst_19 = arith.constant 1.000000e+00 : f32
    %46 = vector.broadcast %cst_19 : f32 to vector<16x128xf32>
    %47 = arith.addf %46, %45 : vector<16x128xf32>
    %48 = arith.mulf %7, %47 : vector<16x128xf32>
    %c0_20 = arith.constant 0 : index
    %c0_21 = arith.constant 0 : index
    %49 = vector.load %arg4[%c0_20, %c0_21] : memref<128x128xf32, #tpu.memory_space<vmem>>, vector<128x128xf32>
    %cst_22 = arith.constant dense<0.000000e+00> : vector<16x128xf32>
    %50 = tpu.matmul %48, %49, %cst_22 {dimension_numbers = #tpu.dot_dimension_numbers<[1], [0], [0], [1], [0, 0, 1, 1], [], []>} : vector<16x128xf32>, vector<128x128xf32>, vector<16x128xf32> -> vector<16x128xf32>
    %c0_23 = arith.constant 0 : index
    %c0_24 = arith.constant 0 : index
    %51 = vector.load %arg5[%c0_23, %c0_24] : memref<1x128xf32, #tpu.memory_space<vmem>>, vector<1x128xf32>
    %52 = vector.broadcast %51 : vector<1x128xf32> to vector<16x128xf32>
    %53 = arith.addf %50, %52 : vector<16x128xf32>
    %c0_25 = arith.constant 0 : index
    %c0_26 = arith.constant 0 : index
    %54 = vector.load %arg6[%c0_25, %c0_26] : memref<16x128xf32, #tpu.memory_space<vmem>>, vector<16x128xf32>
    tpu.vector_store %arg6[%c0_25, %c0_26], %53 {strides = array<i32>} : memref<16x128xf32, #tpu.memory_space<vmem>>, vector<16x128xf32>,
    return
  }
  func.func @transform_0(%arg0: i32) -> (i32, i32) {
    %c0_i32 = arith.constant 0 : i32
    %c0_i32_0 = arith.constant 0 : i32
    return %arg0, %c0_i32 : i32, i32
  }
  func.func @transform_1(%arg0: i32) -> (i32, i32) {
    %c0_i32 = arith.constant 0 : i32
    %c0_i32_0 = arith.constant 0 : i32
    %c0_i32_1 = arith.constant 0 : i32
    return %c0_i32, %c0_i32_0 : i32, i32
  }
  func.func @transform_2(%arg0: i32) -> (i32, i32) {
    %c0_i32 = arith.constant 0 : i32
    %c0_i32_0 = arith.constant 0 : i32
    %c0_i32_1 = arith.constant 0 : i32
    return %c0_i32, %c0_i32_0 : i32, i32
  }
  func.func @transform_3(%arg0: i32) -> (i32, i32) {
    %c0_i32 = arith.constant 0 : i32
    %c0_i32_0 = arith.constant 0 : i32
    %c0_i32_1 = arith.constant 0 : i32
    return %c0_i32, %c0_i32_0 : i32, i32
  }
  func.func @transform_4(%arg0: i32) -> (i32, i32) {
    %c0_i32 = arith.constant 0 : i32
    %c0_i32_0 = arith.constant 0 : i32
    %c0_i32_1 = arith.constant 0 : i32
    return %c0_i32, %c0_i32_0 : i32, i32
  }
  func.func @transform_5(%arg0: i32) -> (i32, i32) {
    %c0_i32 = arith.constant 0 : i32
    %c0_i32_0 = arith.constant 0 : i32
    return %arg0, %c0_i32 : i32, i32
  }
}

module attributes {stable_mosaic.version = 11 : i64} {
  func.func @_mlp_kernel_resident(%arg0: i32, %arg1: memref<16x32xf32, #tpu.memory_space<vmem>>, %arg2: memref<32x128xf32, #tpu.memory_space<vmem>>, %arg3: memref<1x128xf32, #tpu.memory_space<vmem>>, %arg4: memref<128x128xf32, #tpu.memory_space<vmem>>, %arg5: memref<1x128xf32, #tpu.memory_space<vmem>>, %arg6: memref<16x128xf32, #tpu.memory_space<vmem>>) attributes {dimension_semantics = [#tpu.dimension_semantics<parallel>], iteration_bounds = array<i64: 1>, scalar_prefetch = 0 : i64, scratch_operands = 0 : i64, tpu.core_type = #tpu.core_type<tc>, window_params = [{transform_indices = @transform_0, window_bounds = array<i64: 16, 32>}, {pipeline_mode = #tpu.pipeline_mode<synchronous>, transform_indices = @transform_1, window_bounds = array<i64: 32, 128>}, {pipeline_mode = #tpu.pipeline_mode<synchronous>, transform_indices = @transform_2, window_bounds = array<i64: 1, 128>}, {pipeline_mode = #tpu.pipeline_mode<synchronous>, transform_indices = @transform_3, window_bounds = array<i64: 128, 128>}, {pipeline_mode = #tpu.pipeline_mode<synchronous>, transform_indices = @transform_4, window_bounds = array<i64: 1, 128>}, {transform_indices = @transform_5, window_bounds = array<i64: 16, 128>}]} {
    %c0 = arith.constant 0 : index
    %c0_0 = arith.constant 0 : index
    %0 = vector.load %arg1[%c0, %c0_0] : memref<16x32xf32, #tpu.memory_space<vmem>>, vector<16x32xf32>
    %c0_1 = arith.constant 0 : index
    %c0_2 = arith.constant 0 : index
    %1 = vector.load %arg2[%c0_1, %c0_2] : memref<32x128xf32, #tpu.memory_space<vmem>>, vector<32x128xf32>
    %cst = arith.constant dense<0.000000e+00> : vector<16x128xf32>
    %2 = tpu.matmul %0, %1, %cst {dimension_numbers = #tpu.dot_dimension_numbers<[1], [0], [0], [1], [0, 0, 1, 1], [], []>} : vector<16x32xf32>, vector<32x128xf32>, vector<16x128xf32> -> vector<16x128xf32>
    %c0_3 = arith.constant 0 : index
    %c0_4 = arith.constant 0 : index
    %3 = vector.load %arg3[%c0_3, %c0_4] : memref<1x128xf32, #tpu.memory_space<vmem>>, vector<1x128xf32>
    %4 = vector.broadcast %3 : vector<1x128xf32> to vector<16x128xf32>
    %5 = arith.addf %2, %4 : vector<16x128xf32>
    %cst_5 = arith.constant 5.000000e-01 : f32
    %6 = vector.broadcast %cst_5 : f32 to vector<16x128xf32>
    %7 = arith.mulf %6, %5 : vector<16x128xf32>
    %cst_6 = arith.constant 0.707106769 : f32
    %8 = vector.broadcast %cst_6 : f32 to vector<16x128xf32>
    %9 = arith.mulf %5, %8 : vector<16x128xf32>
    %10 = math.absf %9 : vector<16x128xf32>
    %cst_7 = arith.constant 0.327591091 : f32
    %11 = vector.broadcast %cst_7 : f32 to vector<16x128xf32>
    %12 = arith.mulf %11, %10 : vector<16x128xf32>
    %cst_8 = arith.constant 1.000000e+00 : f32
    %13 = vector.broadcast %cst_8 : f32 to vector<16x128xf32>
    %14 = arith.addf %13, %12 : vector<16x128xf32>
    %15 = tpu.reciprocal %14 {approx = true} : vector<16x128xf32> -> vector<16x128xf32>
    %16 = arith.mulf %14, %15 : vector<16x128xf32>
    %cst_9 = arith.constant 2.000000e+00 : f32
    %17 = vector.broadcast %cst_9 : f32 to vector<16x128xf32>
    %18 = arith.subf %17, %16 : vector<16x128xf32>
    %19 = arith.mulf %15, %18 : vector<16x128xf32>
    %cst_10 = arith.constant 1.06140542 : f32
    %20 = vector.broadcast %cst_10 : f32 to vector<16x128xf32>
    %21 = arith.mulf %20, %19 : vector<16x128xf32>
    %cst_11 = arith.constant -1.45315206 : f32
    %22 = vector.broadcast %cst_11 : f32 to vector<16x128xf32>
    %23 = arith.addf %21, %22 : vector<16x128xf32>
    %24 = arith.mulf %23, %19 : vector<16x128xf32>
    %cst_12 = arith.constant 1.42141378 : f32
    %25 = vector.broadcast %cst_12 : f32 to vector<16x128xf32>
    %26 = arith.addf %24, %25 : vector<16x128xf32>
    %27 = arith.mulf %26, %19 : vector<16x128xf32>
    %cst_13 = arith.constant -0.284496725 : f32
    %28 = vector.broadcast %cst_13 : f32 to vector<16x128xf32>
    %29 = arith.addf %27, %28 : vector<16x128xf32>
    %30 = arith.mulf %29, %19 : vector<16x128xf32>
    %cst_14 = arith.constant 0.254829586 : f32
    %31 = vector.broadcast %cst_14 : f32 to vector<16x128xf32>
    %32 = arith.addf %30, %31 : vector<16x128xf32>
    %33 = arith.mulf %32, %19 : vector<16x128xf32>
    %cst_15 = arith.constant 0.000000e+00 : f32
    %34 = vector.broadcast %cst_15 : f32 to vector<16x128xf32>
    %35 = arith.subf %34, %10 : vector<16x128xf32>
    %36 = arith.mulf %35, %10 : vector<16x128xf32>
    %37 = math.exp %36 : vector<16x128xf32>
    %38 = arith.mulf %33, %37 : vector<16x128xf32>
    %cst_16 = arith.constant 1.000000e+00 : f32
    %39 = vector.broadcast %cst_16 : f32 to vector<16x128xf32>
    %40 = arith.subf %39, %38 : vector<16x128xf32>
    %cst_17 = arith.constant 0.000000e+00 : f32
    %41 = vector.broadcast %cst_17 : f32 to vector<16x128xf32>
    %42 = arith.cmpf oge, %9, %41 : vector<16x128xf32>
    %cst_18 = arith.constant 0.000000e+00 : f32
    %43 = vector.broadcast %cst_18 : f32 to vector<16x128xf32>
    %44 = arith.subf %43, %40 : vector<16x128xf32>
    %45 = arith.select %42, %40, %44 : vector<16x128xi1>, vector<16x128xf32>
    %cst_19 = arith.constant 1.000000e+00 : f32
    %46 = vector.broadcast %cst_19 : f32 to vector<16x128xf32>
    %47 = arith.addf %46, %45 : vector<16x128xf32>
    %48 = arith.mulf %7, %47 : vector<16x128xf32>
    %c0_20 = arith.constant 0 : index
    %c0_21 = arith.constant 0 : index
    %49 = vector.load %arg4[%c0_20, %c0_21] : memref<128x128xf32, #tpu.memory_space<vmem>>, vector<128x128xf32>
    %cst_22 = arith.constant dense<0.000000e+00> : vector<16x128xf32>
    %50 = tpu.matmul %48, %49, %cst_22 {dimension_numbers = #tpu.dot_dimension_numbers<[1], [0], [0], [1], [0, 0, 1, 1], [], []>} : vector<16x128xf32>, vector<128x128xf32>, vector<16x128xf32> -> vector<16x128xf32>
    %c0_23 = arith.constant 0 : index
    %c0_24 = arith.constant 0 : index
    %51 = vector.load %arg5[%c0_23, %c0_24] : memref<1x128xf32, #tpu.memory_space<vmem>>, vector<1x128xf32>
    %52 = vector.broadcast %51 : vector<1x128xf32> to vector<16x128xf32>
    %53 = arith.addf %50, %52 : vector<16x128xf32>
    %c0_25 = arith.constant 0 : index
    %c0_26 = arith.constant 0 : index
    %54 = vector.load %arg6[%c0_25, %c0_26] : memref<16x128xf32, #tpu.memory_space<vmem>>, vector<16x128xf32>
    tpu.vector_store %arg6[%c0_25, %c0_26], %53 {strides = array<i32>} : memref<16x128xf32, #tpu.memory_space<vmem>>, vector<16x128xf32>,
    return
  }
  func.func @transform_0(%arg0: i32) -> (i32, i32) {
    %c0_i32 = arith.constant 0 : i32
    %c0_i32_0 = arith.constant 0 : i32
    return %arg0, %c0_i32 : i32, i32
  }
  func.func @transform_1(%arg0: i32) -> (i32, i32) {
    %c0_i32 = arith.constant 0 : i32
    %c0_i32_0 = arith.constant 0 : i32
    %c0_i32_1 = arith.constant 0 : i32
    return %c0_i32, %c0_i32_0 : i32, i32
  }
  func.func @transform_2(%arg0: i32) -> (i32, i32) {
    %c0_i32 = arith.constant 0 : i32
    %c0_i32_0 = arith.constant 0 : i32
    %c0_i32_1 = arith.constant 0 : i32
    return %c0_i32, %c0_i32_0 : i32, i32
  }
  func.func @transform_3(%arg0: i32) -> (i32, i32) {
    %c0_i32 = arith.constant 0 : i32
    %c0_i32_0 = arith.constant 0 : i32
    %c0_i32_1 = arith.constant 0 : i32
    return %c0_i32, %c0_i32_0 : i32, i32
  }
  func.func @transform_4(%arg0: i32) -> (i32, i32) {
    %c0_i32 = arith.constant 0 : i32
    %c0_i32_0 = arith.constant 0 : i32
    %c0_i32_1 = arith.constant 0 : i32
    return %c0_i32, %c0_i32_0 : i32, i32
  }
  func.func @transform_5(%arg0: i32) -> (i32, i32) {
    %c0_i32 = arith.constant 0 : i32
    %c0_i32_0 = arith.constant 0 : i32
    return %arg0, %c0_i32 : i32, i32
  }
}

</mosaic_0001>

<llo_original>
// kernel: tpu_custom_call.1
$region0: #{tpu_custom_call.1}
  #allocation0 [shape = 'u32[]', space=smem, size = 0x4, offset = 0x4, fixed_abs, tag = 'smem constant byte address 0x4 - core index']
  #allocation1 [shape = 'u32[144,128]{1,0:T(1,128)}', space=vmem, size = 0x12000, scoped, tag = 'internal scratch']
  %s0 = inlined_call_operand.hbm [shape: f32[16,32], index: 0, kind: input, shape index: {}]
  %s1 = inlined_call_operand.hbm [shape: f32[32,128], index: 1, kind: input, shape index: {}]
  %s2 = inlined_call_operand.vmem [shape: f32[1,128], index: 2, kind: input, shape index: {}]
  %s3 = inlined_call_operand.hbm [shape: f32[128,128], index: 3, kind: input, shape index: {}]
  %s4 = inlined_call_operand.vmem [shape: f32[1,128], index: 4, kind: input, shape index: {}]
  %s5 = inlined_call_operand.hbm [shape: f32[16,128], index: 5, kind: output, shape index: {}]
  %s6 = sld [smem:[#allocation0]]
  $region42: #{tpu_custom_call.1} parent=0
    _
  %s8 = ssub.s32 1, %s6
  %s9 = scalar_select 0, %s8, %s6
  $region1: #{tpu_custom_call.1} parent=0
    #allocation2 [shape = 'u8[8192]{0}', space=vmem, size = 0x2000, scoped, tag = 'input window, operand 0, single buffered']
    #allocation3 [shape = 's32[1]{0}', space=sflag, size = 0x4, scoped, tag = 'scoped memory for tpu_custom_call.1']
    #allocation4 [shape = 's32[1]{0}', space=sflag, size = 0x4, scoped, tag = 'scoped memory for tpu_custom_call.1']
    #allocation5 [shape = 'u8[16384]{0}', space=vmem, size = 0x4000, scoped, tag = 'input window, operand 1, single buffered']
    #allocation6 [shape = 's32[1]{0}', space=sflag, size = 0x4, scoped, tag = 'scoped memory for tpu_custom_call.1']
    #allocation7 [shape = 'u8[65536]{0}', space=vmem, size = 0x10000, scoped, tag = 'input window, operand 3, single buffered']
    #allocation8 [shape = 'u8[8192]{0}', space=vmem, size = 0x2000, scoped, tag = 'output window, operand 0, single buffered']
    %10 = vsyncpa [#allocation3], 0
    %11 = vsyncpa [#allocation6], 0
    %12 = vsyncpa [#allocation4], 0
    // Predicated region
    $region2: #{tpu_custom_call.1} parent=1 // pred_check
      _
    $region3: #{tpu_custom_call.1} parent=1 // pred_check_branch
      %14 = sbr.rel (0) target = $region5
    $region4: #{tpu_custom_call.1} parent=1 // pred_region
      %s16 = ssub.s32 256, 256
      %17 = vsyncadd [#allocation3], %s16
      %s18 = sshll.u32 [#allocation2], 4
      %s19 = int_to_ptr.vmem [resolvable:$true] %s18
      %24 = dma.hbm_to_vmem [thread:$0]  %s0, 256, %s19, [#allocation3], 128, 128, 8
    $region5: #{tpu_custom_call.1} parent=1 // pred_fallthru
      _
    // Predicated region
    $region6: #{tpu_custom_call.1} parent=1 // pred_check
      _
    $region7: #{tpu_custom_call.1} parent=1 // pred_check_branch
      %26 = sbr.rel (0) target = $region9
    $region8: #{tpu_custom_call.1} parent=1 // pred_region
      %s28 = ssub.s32 512, 512
      %29 = vsyncadd [#allocation6], %s28
      %s30 = sshll.u32 [#allocation5], 4
      %s31 = int_to_ptr.vmem [resolvable:$true] %s30
      %36 = dma.hbm_to_vmem [thread:$0]  %s1, 512, %s31, [#allocation6], 128, 128, 8
    $region9: #{tpu_custom_call.1} parent=1 // pred_fallthru
      _
    // Predicated region
    $region10: #{tpu_custom_call.1} parent=1 // pred_check
      _
    $region11: #{tpu_custom_call.1} parent=1 // pred_check_branch
      %38 = sbr.rel (0) target = $region13
    $region12: #{tpu_custom_call.1} parent=1 // pred_region
      _
    $region13: #{tpu_custom_call.1} parent=1 // pred_fallthru
      _
    // Predicated region
    $region14: #{tpu_custom_call.1} parent=1 // pred_check
      _
    $region15: #{tpu_custom_call.1} parent=1 // pred_check_branch
      %40 = sbr.rel (0) target = $region17
    $region16: #{tpu_custom_call.1} parent=1 // pred_region
      %s42 = ssub.s32 2048, 2048
      %43 = vsyncadd [#allocation6], %s42
      %s44 = sshll.u32 [#allocation7], 4
      %s45 = int_to_ptr.vmem [resolvable:$true] %s44
      %50 = dma.hbm_to_vmem [thread:$0]  %s3, 2048, %s45, [#allocation6], 128, 128, 8
    $region17: #{tpu_custom_call.1} parent=1 // pred_fallthru
      _
    // Predicated region
    $region18: #{tpu_custom_call.1} parent=1 // pred_check
      _
    $region19: #{tpu_custom_call.1} parent=1 // pred_check_branch
      %52 = sbr.rel (0) target = $region21
    $region20: #{tpu_custom_call.1} parent=1 // pred_region
      _
    $region21: #{tpu_custom_call.1} parent=1 // pred_fallthru
      _
    // Predicated region
    $region22: #{tpu_custom_call.1} parent=1 // pred_check
      _
    $region23: #{tpu_custom_call.1} parent=1 // pred_check_branch
      %54 = sbr.rel (0) target = $region25
    $region24: #{tpu_custom_call.1} parent=1 // pred_region
      %55 = dma.done [#allocation3], 256
    $region25: #{tpu_custom_call.1} parent=1 // pred_fallthru
      _
    // Predicated region
    $region26: #{tpu_custom_call.1} parent=1 // pred_check
      _
    $region27: #{tpu_custom_call.1} parent=1 // pred_check_branch
      %57 = sbr.rel (0) target = $region29
    $region28: #{tpu_custom_call.1} parent=1 // pred_region
      %58 = dma.done [#allocation6], 512
    $region29: #{tpu_custom_call.1} parent=1 // pred_fallthru
      _
    // Predicated region
    $region30: #{tpu_custom_call.1} parent=1 // pred_check
      _
    $region31: #{tpu_custom_call.1} parent=1 // pred_check_branch
      %60 = sbr.rel (0) target = $region33
    $region32: #{tpu_custom_call.1} parent=1 // pred_region
      %61 = dma.done [#allocation6], 2048
    $region33: #{tpu_custom_call.1} parent=1 // pred_fallthru
      _
    %v62 = vld [vmem:[#allocation2] sm:$0xff]
    %v63 = vld [vmem:[#allocation2 + $0x8] sm:$0xff]
    %v64 = vld [vmem:[#allocation5] sm:$0xff]
    %v65 = vld [vmem:[#allocation5 + $0x8] sm:$0xff]
    %v66 = vld [vmem:[#allocation5 + $0x10] sm:$0xff]
    %v67 = vld [vmem:[#allocation5 + $0x18] sm:$0xff]
    %v68 = vld [vmem:[%s2] sm:$0x1]
    %v70 = vlaneseq
    %v71 = vshrl.u32 %v70, 7
    %v72 = vsub.s32 0, %v71
    %v73 = vrot.slane %v68, %v72
    %vm75 = vcmask 261120
    %v77 = vsel %vm75, %v62, 0
    %v80 = vsel %vm75, %v63, 0
    %82 = vmatprep.subr.mxu0 0.0
    %83 = vmatpush1.msra.mxu0 %v64
    %84 = vmatprep.subr.mxu0 0.0
    %85 = vmatpush1.msra.mxu0 %v65
    %86 = vmatprep.subr.mxu0 0.0
    %87 = vmatpush1.msra.mxu0 %v66
    %88 = vmatprep.subr.mxu0 0.0
    %89 = vmatpush1.msra.mxu0 %v67
    %90 = vmatprep.subr.mxu0 0.0
    %91 = vmatpush1.msra.mxu0 0.0
    %92 = vmatprep.subr.mxu0 0.0
    %93 = vmatpush1.msra.mxu0 0.0
    %94 = vmatprep.subr.mxu0 0.0
    %95 = vmatpush1.msra.mxu0 0.0
    %96 = vmatprep.subr.mxu0 0.0
    %97 = vmatpush1.msra.mxu0 0.0
    %98 = vmatprep.subr.mxu0 0.0
    %99 = vmatpush1.msra.mxu0 0.0
    %100 = vmatprep.subr.mxu0 0.0
    %101 = vmatpush1.msra.mxu0 0.0
    %102 = vmatprep.subr.mxu0 0.0
    %103 = vmatpush1.msra.mxu0 0.0
    %104 = vmatprep.subr.mxu0 0.0
    %105 = vmatpush1.msra.mxu0 0.0
    %106 = vmatprep.subr.mxu0 0.0
    %107 = vmatpush1.msra.mxu0 0.0
    %108 = vmatprep.subr.mxu0 0.0
    %109 = vmatpush1.msra.mxu0 0.0
    %110 = vmatprep.subr.mxu0 0.0
    %111 = vmatpush1.msra.mxu0 0.0
    %112 = vmatprep.subr.mxu0 0.0
    %113 = vmatpush1.msra.mxu0 0.0
    %114 = vmatprep.subr.mxu0 0.0
    %115 = vmatpush1.msra.mxu0 0.0
    %116 = vmatprep.subr.mxu0 0.0
    %117 = vmatpush1.msra.mxu0 0.0
    %118 = vmatprep.subr.mxu0 0.0
    %119 = vmatpush1.msra.mxu0 0.0
    %120 = vmatprep.subr.mxu0 0.0
    %121 = vmatpush1.msra.mxu0 0.0
    %122 = vmatprep.subr.mxu0 0.0
    %123 = vmatpush1.msra.mxu0 0.0
    %124 = vmatprep.subr.mxu0 0.0
    %125 = vmatpush1.msra.mxu0 0.0
    %126 = vmatprep.subr.mxu0 0.0
    %127 = vmatpush1.msra.mxu0 0.0
    %128 = vmatprep.subr.mxu0 0.0
    %129 = vmatpush1.msra.mxu0 0.0
    %130 = vmatprep.subr.mxu0 0.0
    %131 = vmatpush1.msra.mxu0 0.0
    %132 = vmatprep.subr.mxu0 0.0
    %133 = vmatpush1.msra.mxu0 0.0
    %134 = vmatprep.subr.mxu0 0.0
    %135 = vmatpush1.msra.mxu0 0.0
    %136 = vmatprep.subr.mxu0 0.0
    %137 = vmatpush1.msra.mxu0 0.0
    %138 = vmatprep.subr.mxu0 0.0
    %139 = vmatpush1.msra.mxu0 0.0
    %140 = vmatprep.subr.mxu0 0.0
    %141 = vmatpush1.msra.mxu0 0.0
    %142 = vmatprep.subr.mxu0 0.0
    %143 = vmatpush1.msra.mxu0 0.0
    %144 = vmatprep.subr.mxu0 0.0
    %145 = vmatpush1.msra.mxu0 0.0
    %146 = vmatprep.mubr.f32.mxu0 0.0
    %147 = vmatmul.mubr.f32.gmra.mrb[0].mxu0 %v77
    %v148 = vpop.f32.mrb[0].mxu0
    %v149 = vadd.f32 %v73, %v148
    %v150 = vpop.f32.mrb[0].mxu0
    %151 = vmatprep.mubr.f32.mxu0 0.0
    %152 = vmatmul.mubr.f32.gmra.mrb[0].mxu0 %v80
    %v153 = vpop.f32.mrb[0].mxu0
    %v154 = vadd.f32 %v73, %v153
    %v155 = vpop.f32.mrb[0].mxu0
    %156 = vdwg.mxu0
    %v157 = vmul.f32 %v149, 0.5
    %v158 = vmul.f32 %v154, 0.5
    %v159 = vmul.f32 %v149, 0.70710677
    %v160 = vmul.f32 %v154, 0.70710677
    %v161 = vand.u32 2147483647, %v159
    %v162 = vand.u32 2147483647, %v160
    %v163 = vmul.f32 %v161, 0.3275911
    %v164 = vmul.f32 %v162, 0.3275911
    %v165 = vadd.f32 %v163, 1.0
    %v166 = vadd.f32 %v164, 1.0
    %v167 = vrcp.pop %v165
    %v168 = vrcp.pop %v166
    %v169 = vmul.f32 %v165, %v167
    %v170 = vmul.f32 %v166, %v168
    %v171 = vsub.f32 2.0, %v169
    %v172 = vsub.f32 2.0, %v170
    %v173 = vmul.f32 %v167, %v171
    %v174 = vmul.f32 %v168, %v172
    %v175 = vmul.f32 %v173, 1.0614054
    %v176 = vmul.f32 %v174, 1.0614054
    %v177 = vadd.f32 %v175, -1.4531521
    %v178 = vadd.f32 %v176, -1.4531521
    %v179 = vmul.f32 %v177, %v173
    %v180 = vmul.f32 %v178, %v174
    %v181 = vadd.f32 %v179, 1.4214138
    %v182 = vadd.f32 %v180, 1.4214138
    %v183 = vmul.f32 %v181, %v173
    %v184 = vmul.f32 %v182, %v174
    %v185 = vadd.f32 %v183, -0.28449672
    %v186 = vadd.f32 %v184, -0.28449672
    %v187 = vmul.f32 %v185, %v173
    %v188 = vmul.f32 %v186, %v174
    %v189 = vadd.f32 %v187, 0.2548296
    %v190 = vadd.f32 %v188, 0.2548296
    %v191 = vmul.f32 %v189, %v173
    %v192 = vmul.f32 %v190, %v174
    %v193 = vsub.f32 0.0, %v161
    %v194 = vsub.f32 0.0, %v162
    %v195 = vmul.f32 %v193, %v161
    %v196 = vmul.f32 %v194, %v162
    %v197 = vmul.f32 %v195, 1.442695
    %v198 = vpow.pop %v197
    %v199 = vmul.f32 %v196, 1.442695
    %v200 = vpow.pop %v199
    %v201 = vmul.f32 %v191, %v198
    %v202 = vmul.f32 %v192, %v200
    %v203 = vsub.f32 1.0, %v201
    %v204 = vsub.f32 1.0, %v202
    %vm205 = vcmp.ge.f32.partialorder %v159, 0.0
    %vm206 = vcmp.ge.f32.partialorder %v160, 0.0
    %v207 = vsub.f32 0.0, %v203
    %v208 = vsub.f32 0.0, %v204
    %v209 = vsel %vm205, %v203, %v207
    %v210 = vsel %vm206, %v204, %v208
    %v211 = vadd.f32 %v209, 1.0
    %v212 = vadd.f32 %v210, 1.0
    %v213 = vmul.f32 %v157, %v211
    %v214 = vmul.f32 %v158, %v212
    %v215 = vld [vmem:[#allocation7] sm:$0xff]
    %v216 = vld [vmem:[#allocation7 + $0x8] sm:$0xff]
    %v217 = vld [vmem:[#allocation7 + $0x10] sm:$0xff]
    %v218 = vld [vmem:[#allocation7 + $0x18] sm:$0xff]
    %v219 = vld [vmem:[#allocation7 + $0x20] sm:$0xff]
    %v220 = vld [vmem:[#allocation7 + $0x28] sm:$0xff]
    %v221 = vld [vmem:[#allocation7 + $0x30] sm:$0xff]
    %v222 = vld [vmem:[#allocation7 + $0x38] sm:$0xff]
    %v223 = vld [vmem:[#allocation7 + $0x40] sm:$0xff]
    %v224 = vld [vmem:[#allocation7 + $0x48] sm:$0xff]
    %v225 = vld [vmem:[#allocation7 + $0x50] sm:$0xff]
    %v226 = vld [vmem:[#allocation7 + $0x58] sm:$0xff]
    %v227 = vld [vmem:[#allocation7 + $0x60] sm:$0xff]
    %v228 = vld [vmem:[#allocation7 + $0x68] sm:$0xff]
    %v229 = vld [vmem:[#allocation7 + $0x70] sm:$0xff]
    %v230 = vld [vmem:[#allocation7 + $0x78] sm:$0xff]
    %v231 = vld [vmem:[%s4] sm:$0x1]
    %v233 = vlaneseq
    %v234 = vshrl.u32 %v233, 7
    %v235 = vsub.s32 0, %v234
    %v236 = vrot.slane %v231, %v235
    %238 = vmatprep.subr.mxu0 0.0
    %239 = vmatpush1.msra.mxu0 %v215
    %240 = vmatprep.subr.mxu0 0.0
    %241 = vmatpush1.msra.mxu0 %v216
    %242 = vmatprep.subr.mxu0 0.0
    %243 = vmatpush1.msra.mxu0 %v217
    %244 = vmatprep.subr.mxu0 0.0
    %245 = vmatpush1.msra.mxu0 %v218
    %246 = vmatprep.subr.mxu0 0.0
    %247 = vmatpush1.msra.mxu0 %v219
    %248 = vmatprep.subr.mxu0 0.0
    %249 = vmatpush1.msra.mxu0 %v220
    %250 = vmatprep.subr.mxu0 0.0
    %251 = vmatpush1.msra.mxu0 %v221
    %252 = vmatprep.subr.mxu0 0.0
    %253 = vmatpush1.msra.mxu0 %v222
    %254 = vmatprep.subr.mxu0 0.0
    %255 = vmatpush1.msra.mxu0 %v223
    %256 = vmatprep.subr.mxu0 0.0
    %257 = vmatpush1.msra.mxu0 %v224
    %258 = vmatprep.subr.mxu0 0.0
    %259 = vmatpush1.msra.mxu0 %v225
    %260 = vmatprep.subr.mxu0 0.0
    %261 = vmatpush1.msra.mxu0 %v226
    %262 = vmatprep.subr.mxu0 0.0
    %263 = vmatpush1.msra.mxu0 %v227
    %264 = vmatprep.subr.mxu0 0.0
    %265 = vmatpush1.msra.mxu0 %v228
    %266 = vmatprep.subr.mxu0 0.0
    %267 = vmatpush1.msra.mxu0 %v229
    %268 = vmatprep.subr.mxu0 0.0
    %269 = vmatpush1.msra.mxu0 %v230
    %270 = vmatprep.subr.mxu0 0.0
    %271 = vmatpush1.msra.mxu0 0.0
    %272 = vmatprep.subr.mxu0 0.0
    %273 = vmatpush1.msra.mxu0 0.0
    %274 = vmatprep.subr.mxu0 0.0
    %275 = vmatpush1.msra.mxu0 0.0
    %276 = vmatprep.subr.mxu0 0.0
    %277 = vmatpush1.msra.mxu0 0.0
    %278 = vmatprep.subr.mxu0 0.0
    %279 = vmatpush1.msra.mxu0 0.0
    %280 = vmatprep.subr.mxu0 0.0
    %281 = vmatpush1.msra.mxu0 0.0
    %282 = vmatprep.subr.mxu0 0.0
    %283 = vmatpush1.msra.mxu0 0.0
    %284 = vmatprep.subr.mxu0 0.0
    %285 = vmatpush1.msra.mxu0 0.0
    %286 = vmatprep.subr.mxu0 0.0
    %287 = vmatpush1.msra.mxu0 0.0
    %288 = vmatprep.subr.mxu0 0.0
    %289 = vmatpush1.msra.mxu0 0.0
    %290 = vmatprep.subr.mxu0 0.0
    %291 = vmatpush1.msra.mxu0 0.0
    %292 = vmatprep.subr.mxu0 0.0
    %293 = vmatpush1.msra.mxu0 0.0
    %294 = vmatprep.subr.mxu0 0.0
    %295 = vmatpush1.msra.mxu0 0.0
    %296 = vmatprep.subr.mxu0 0.0
    %297 = vmatpush1.msra.mxu0 0.0
    %298 = vmatprep.subr.mxu0 0.0
    %299 = vmatpush1.msra.mxu0 0.0
    %300 = vmatprep.subr.mxu0 0.0
    %301 = vmatpush1.msra.mxu0 0.0
    %302 = vmatprep.mubr.f32.mxu0 0.0
    %303 = vmatmul.mubr.f32.gmra.mrb[0].mxu0 %v213
    %v304 = vpop.f32.mrb[0].mxu0
    %v305 = vadd.f32 %v236, %v304
    %v306 = vpop.f32.mrb[0].mxu0
    %307 = vmatprep.mubr.f32.mxu0 0.0
    %308 = vmatmul.mubr.f32.gmra.mrb[0].mxu0 %v214
    %v309 = vpop.f32.mrb[0].mxu0
    %v310 = vadd.f32 %v236, %v309
    %v311 = vpop.f32.mrb[0].mxu0
    %312 = vdwg.mxu0
    %313 = vst [vmem:[#allocation8] sm:$0xff] %v305
    %314 = vst [vmem:[#allocation8 + $0x8] sm:$0xff] %v310
    // Predicated region
    $region34: #{tpu_custom_call.1} parent=1 // pred_check
      _
    $region35: #{tpu_custom_call.1} parent=1 // pred_check_branch
      %316 = sbr.rel (0) target = $region37
    $region36: #{tpu_custom_call.1} parent=1 // pred_region
      %s318 = ssub.s32 256, 256
      %319 = vsyncadd [#allocation4], %s318
      %s320 = sshll.u32 [#allocation8], 4
      %s321 = int_to_ptr.vmem [resolvable:$true] %s320
      %326 = dma.vmem_to_hbm [thread:$0]  %s321, 256, %s5, [#allocation4], 128, 128, 8
    $region37: #{tpu_custom_call.1} parent=1 // pred_fallthru
      _
    // Predicated region
    $region38: #{tpu_custom_call.1} parent=1 // pred_check
      _
    $region39: #{tpu_custom_call.1} parent=1 // pred_check_branch
      %328 = sbr.rel (0) target = $region41
    $region40: #{tpu_custom_call.1} parent=1 // pred_region
      %329 = dma.done [#allocation4], 256
    $region41: #{tpu_custom_call.1} parent=1 // pred_fallthru
      _
    %330 = vsyncpa [#allocation3], 1
    %331 = vsyncpa [#allocation6], 1
    %332 = vsyncpa [#allocation4], 1

// kernel: tpu_custom_call.1
$region0: #{tpu_custom_call.1}
  #allocation0 [shape = 'u32[]', space=smem, size = 0x4, offset = 0x4, fixed_abs, tag = 'smem constant byte address 0x4 - core index']
  #allocation1 [shape = 'u32[144,128]{1,0:T(1,128)}', space=vmem, size = 0x12000, scoped, tag = 'internal scratch']
  %s0 = inlined_call_operand.hbm [shape: f32[16,32], index: 0, kind: input, shape index: {}]
  %s1 = inlined_call_operand.hbm [shape: f32[32,128], index: 1, kind: input, shape index: {}]
  %s2 = inlined_call_operand.vmem [shape: f32[1,128], index: 2, kind: input, shape index: {}]
  %s3 = inlined_call_operand.hbm [shape: f32[128,128], index: 3, kind: input, shape index: {}]
  %s4 = inlined_call_operand.vmem [shape: f32[1,128], index: 4, kind: input, shape index: {}]
  %s5 = inlined_call_operand.hbm [shape: f32[16,128], index: 5, kind: output, shape index: {}]
  %s6 = sld [smem:[#allocation0]]
  $region42: #{tpu_custom_call.1} parent=0
    _
  %s8 = ssub.s32 1, %s6
  %s9 = scalar_select 0, %s8, %s6
  $region1: #{tpu_custom_call.1} parent=0
    #allocation2 [shape = 'u8[8192]{0}', space=vmem, size = 0x2000, scoped, tag = 'input window, operand 0, single buffered']
    #allocation3 [shape = 's32[1]{0}', space=sflag, size = 0x4, scoped, tag = 'scoped memory for tpu_custom_call.1']
    #allocation4 [shape = 's32[1]{0}', space=sflag, size = 0x4, scoped, tag = 'scoped memory for tpu_custom_call.1']
    #allocation5 [shape = 'u8[16384]{0}', space=vmem, size = 0x4000, scoped, tag = 'input window, operand 1, single buffered']
    #allocation6 [shape = 's32[1]{0}', space=sflag, size = 0x4, scoped, tag = 'scoped memory for tpu_custom_call.1']
    #allocation7 [shape = 'u8[65536]{0}', space=vmem, size = 0x10000, scoped, tag = 'input window, operand 3, single buffered']
    #allocation8 [shape = 'u8[8192]{0}', space=vmem, size = 0x2000, scoped, tag = 'output window, operand 0, single buffered']
    %10 = vsyncpa [#allocation3], 0
    %11 = vsyncpa [#allocation6], 0
    %12 = vsyncpa [#allocation4], 0
    // Predicated region
    $region2: #{tpu_custom_call.1} parent=1 // pred_check
      _
    $region3: #{tpu_custom_call.1} parent=1 // pred_check_branch
      %14 = sbr.rel (0) target = $region5
    $region4: #{tpu_custom_call.1} parent=1 // pred_region
      %s16 = ssub.s32 256, 256
      %17 = vsyncadd [#allocation3], %s16
      %s18 = sshll.u32 [#allocation2], 4
      %s19 = int_to_ptr.vmem [resolvable:$true] %s18
      %24 = dma.hbm_to_vmem [thread:$0]  %s0, 256, %s19, [#allocation3], 128, 128, 8
    $region5: #{tpu_custom_call.1} parent=1 // pred_fallthru
      _
    // Predicated region
    $region6: #{tpu_custom_call.1} parent=1 // pred_check
      _
    $region7: #{tpu_custom_call.1} parent=1 // pred_check_branch
      %26 = sbr.rel (0) target = $region9
    $region8: #{tpu_custom_call.1} parent=1 // pred_region
      %s28 = ssub.s32 512, 512
      %29 = vsyncadd [#allocation6], %s28
      %s30 = sshll.u32 [#allocation5], 4
      %s31 = int_to_ptr.vmem [resolvable:$true] %s30
      %36 = dma.hbm_to_vmem [thread:$0]  %s1, 512, %s31, [#allocation6], 128, 128, 8
    $region9: #{tpu_custom_call.1} parent=1 // pred_fallthru
      _
    // Predicated region
    $region10: #{tpu_custom_call.1} parent=1 // pred_check
      _
    $region11: #{tpu_custom_call.1} parent=1 // pred_check_branch
      %38 = sbr.rel (0) target = $region13
    $region12: #{tpu_custom_call.1} parent=1 // pred_region
      _
    $region13: #{tpu_custom_call.1} parent=1 // pred_fallthru
      _
    // Predicated region
    $region14: #{tpu_custom_call.1} parent=1 // pred_check
      _
    $region15: #{tpu_custom_call.1} parent=1 // pred_check_branch
      %40 = sbr.rel (0) target = $region17
    $region16: #{tpu_custom_call.1} parent=1 // pred_region
      %s42 = ssub.s32 2048, 2048
      %43 = vsyncadd [#allocation6], %s42
      %s44 = sshll.u32 [#allocation7], 4
      %s45 = int_to_ptr.vmem [resolvable:$true] %s44
      %50 = dma.hbm_to_vmem [thread:$0]  %s3, 2048, %s45, [#allocation6], 128, 128, 8
    $region17: #{tpu_custom_call.1} parent=1 // pred_fallthru
      _
    // Predicated region
    $region18: #{tpu_custom_call.1} parent=1 // pred_check
      _
    $region19: #{tpu_custom_call.1} parent=1 // pred_check_branch
      %52 = sbr.rel (0) target = $region21
    $region20: #{tpu_custom_call.1} parent=1 // pred_region
      _
    $region21: #{tpu_custom_call.1} parent=1 // pred_fallthru
      _
    // Predicated region
    $region22: #{tpu_custom_call.1} parent=1 // pred_check
      _
    $region23: #{tpu_custom_call.1} parent=1 // pred_check_branch
      %54 = sbr.rel (0) target = $region25
    $region24: #{tpu_custom_call.1} parent=1 // pred_region
      %55 = dma.done [#allocation3], 256
    $region25: #{tpu_custom_call.1} parent=1 // pred_fallthru
      _
    // Predicated region
    $region26: #{tpu_custom_call.1} parent=1 // pred_check
      _
    $region27: #{tpu_custom_call.1} parent=1 // pred_check_branch
      %57 = sbr.rel (0) target = $region29
    $region28: #{tpu_custom_call.1} parent=1 // pred_region
      %58 = dma.done [#allocation6], 512
    $region29: #{tpu_custom_call.1} parent=1 // pred_fallthru
      _
    // Predicated region
    $region30: #{tpu_custom_call.1} parent=1 // pred_check
      _
    $region31: #{tpu_custom_call.1} parent=1 // pred_check_branch
      %60 = sbr.rel (0) target = $region33
    $region32: #{tpu_custom_call.1} parent=1 // pred_region
      %61 = dma.done [#allocation6], 2048
    $region33: #{tpu_custom_call.1} parent=1 // pred_fallthru
      _
    %v62 = vld [vmem:[#allocation2] sm:$0xff]
    %v63 = vld [vmem:[#allocation2 + $0x8] sm:$0xff]
    %v64 = vld [vmem:[#allocation5] sm:$0xff]
    %v65 = vld [vmem:[#allocation5 + $0x8] sm:$0xff]
    %v66 = vld [vmem:[#allocation5 + $0x10] sm:$0xff]
    %v67 = vld [vmem:[#allocation5 + $0x18] sm:$0xff]
    %v68 = vld [vmem:[%s2] sm:$0x1]
    %v70 = vlaneseq
    %v71 = vshrl.u32 %v70, 7
    %v72 = vsub.s32 0, %v71
    %v73 = vrot.slane %v68, %v72
    %vm75 = vcmask 261120
    %v77 = vsel %vm75, %v62, 0
    %v80 = vsel %vm75, %v63, 0
    %82 = vmatprep.subr.mxu0 0.0
    %83 = vmatpush1.msra.mxu0 %v64
    %84 = vmatprep.subr.mxu0 0.0
    %85 = vmatpush1.msra.mxu0 %v65
    %86 = vmatprep.subr.mxu0 0.0
    %87 = vmatpush1.msra.mxu0 %v66
    %88 = vmatprep.subr.mxu0 0.0
    %89 = vmatpush1.msra.mxu0 %v67
    %90 = vmatprep.subr.mxu0 0.0
    %91 = vmatpush1.msra.mxu0 0.0
    %92 = vmatprep.subr.mxu0 0.0
    %93 = vmatpush1.msra.mxu0 0.0
    %94 = vmatprep.subr.mxu0 0.0
    %95 = vmatpush1.msra.mxu0 0.0
    %96 = vmatprep.subr.mxu0 0.0
    %97 = vmatpush1.msra.mxu0 0.0
    %98 = vmatprep.subr.mxu0 0.0
    %99 = vmatpush1.msra.mxu0 0.0
    %100 = vmatprep.subr.mxu0 0.0
    %101 = vmatpush1.msra.mxu0 0.0
    %102 = vmatprep.subr.mxu0 0.0
    %103 = vmatpush1.msra.mxu0 0.0
    %104 = vmatprep.subr.mxu0 0.0
    %105 = vmatpush1.msra.mxu0 0.0
    %106 = vmatprep.subr.mxu0 0.0
    %107 = vmatpush1.msra.mxu0 0.0
    %108 = vmatprep.subr.mxu0 0.0
    %109 = vmatpush1.msra.mxu0 0.0
    %110 = vmatprep.subr.mxu0 0.0
    %111 = vmatpush1.msra.mxu0 0.0
    %112 = vmatprep.subr.mxu0 0.0
    %113 = vmatpush1.msra.mxu0 0.0
    %114 = vmatprep.subr.mxu0 0.0
    %115 = vmatpush1.msra.mxu0 0.0
    %116 = vmatprep.subr.mxu0 0.0
    %117 = vmatpush1.msra.mxu0 0.0
    %118 = vmatprep.subr.mxu0 0.0
    %119 = vmatpush1.msra.mxu0 0.0
    %120 = vmatprep.subr.mxu0 0.0
    %121 = vmatpush1.msra.mxu0 0.0
    %122 = vmatprep.subr.mxu0 0.0
    %123 = vmatpush1.msra.mxu0 0.0
    %124 = vmatprep.subr.mxu0 0.0
    %125 = vmatpush1.msra.mxu0 0.0
    %126 = vmatprep.subr.mxu0 0.0
    %127 = vmatpush1.msra.mxu0 0.0
    %128 = vmatprep.subr.mxu0 0.0
    %129 = vmatpush1.msra.mxu0 0.0
    %130 = vmatprep.subr.mxu0 0.0
    %131 = vmatpush1.msra.mxu0 0.0
    %132 = vmatprep.subr.mxu0 0.0
    %133 = vmatpush1.msra.mxu0 0.0
    %134 = vmatprep.subr.mxu0 0.0
    %135 = vmatpush1.msra.mxu0 0.0
    %136 = vmatprep.subr.mxu0 0.0
    %137 = vmatpush1.msra.mxu0 0.0
    %138 = vmatprep.subr.mxu0 0.0
    %139 = vmatpush1.msra.mxu0 0.0
    %140 = vmatprep.subr.mxu0 0.0
    %141 = vmatpush1.msra.mxu0 0.0
    %142 = vmatprep.subr.mxu0 0.0
    %143 = vmatpush1.msra.mxu0 0.0
    %144 = vmatprep.subr.mxu0 0.0
    %145 = vmatpush1.msra.mxu0 0.0
    %146 = vmatprep.mubr.f32.mxu0 0.0
    %147 = vmatmul.mubr.f32.gmra.mrb[0].mxu0 %v77
    %v148 = vpop.f32.mrb[0].mxu0
    %v149 = vadd.f32 %v73, %v148
    %v150 = vpop.f32.mrb[0].mxu0
    %151 = vmatprep.mubr.f32.mxu0 0.0
    %152 = vmatmul.mubr.f32.gmra.mrb[0].mxu0 %v80
    %v153 = vpop.f32.mrb[0].mxu0
    %v154 = vadd.f32 %v73, %v153
    %v155 = vpop.f32.mrb[0].mxu0
    %156 = vdwg.mxu0
    %v157 = vmul.f32 %v149, 0.5
    %v158 = vmul.f32 %v154, 0.5
    %v159 = vmul.f32 %v149, 0.70710677
    %v160 = vmul.f32 %v154, 0.70710677
    %v161 = vand.u32 2147483647, %v159
    %v162 = vand.u32 2147483647, %v160
    %v163 = vmul.f32 %v161, 0.3275911
    %v164 = vmul.f32 %v162, 0.3275911
    %v165 = vadd.f32 %v163, 1.0
    %v166 = vadd.f32 %v164, 1.0
    %v167 = vrcp.pop %v165
    %v168 = vrcp.pop %v166
    %v169 = vmul.f32 %v165, %v167
    %v170 = vmul.f32 %v166, %v168
    %v171 = vsub.f32 2.0, %v169
    %v172 = vsub.f32 2.0, %v170
    %v173 = vmul.f32 %v167, %v171
    %v174 = vmul.f32 %v168, %v172
    %v175 = vmul.f32 %v173, 1.0614054
    %v176 = vmul.f32 %v174, 1.0614054
    %v177 = vadd.f32 %v175, -1.4531521
    %v178 = vadd.f32 %v176, -1.4531521
    %v179 = vmul.f32 %v177, %v173
    %v180 = vmul.f32 %v178, %v174
    %v181 = vadd.f32 %v179, 1.4214138
    %v182 = vadd.f32 %v180, 1.4214138
    %v183 = vmul.f32 %v181, %v173
    %v184 = vmul.f32 %v182, %v174
    %v185 = vadd.f32 %v183, -0.28449672
    %v186 = vadd.f32 %v184, -0.28449672
    %v187 = vmul.f32 %v185, %v173
    %v188 = vmul.f32 %v186, %v174
    %v189 = vadd.f32 %v187, 0.2548296
    %v190 = vadd.f32 %v188, 0.2548296
    %v191 = vmul.f32 %v189, %v173
    %v192 = vmul.f32 %v190, %v174
    %v193 = vsub.f32 0.0, %v161
    %v194 = vsub.f32 0.0, %v162
    %v195 = vmul.f32 %v193, %v161
    %v196 = vmul.f32 %v194, %v162
    %v197 = vmul.f32 %v195, 1.442695
    %v198 = vpow.pop %v197
    %v199 = vmul.f32 %v196, 1.442695
    %v200 = vpow.pop %v199
    %v201 = vmul.f32 %v191, %v198
    %v202 = vmul.f32 %v192, %v200
    %v203 = vsub.f32 1.0, %v201
    %v204 = vsub.f32 1.0, %v202
    %vm205 = vcmp.ge.f32.partialorder %v159, 0.0
    %vm206 = vcmp.ge.f32.partialorder %v160, 0.0
    %v207 = vsub.f32 0.0, %v203
    %v208 = vsub.f32 0.0, %v204
    %v209 = vsel %vm205, %v203, %v207
    %v210 = vsel %vm206, %v204, %v208
    %v211 = vadd.f32 %v209, 1.0
    %v212 = vadd.f32 %v210, 1.0
    %v213 = vmul.f32 %v157, %v211
    %v214 = vmul.f32 %v158, %v212
    %v215 = vld [vmem:[#allocation7] sm:$0xff]
    %v216 = vld [vmem:[#allocation7 + $0x8] sm:$0xff]
    %v217 = vld [vmem:[#allocation7 + $0x10] sm:$0xff]
    %v218 = vld [vmem:[#allocation7 + $0x18] sm:$0xff]
    %v219 = vld [vmem:[#allocation7 + $0x20] sm:$0xff]
    %v220 = vld [vmem:[#allocation7 + $0x28] sm:$0xff]
    %v221 = vld [vmem:[#allocation7 + $0x30] sm:$0xff]
    %v222 = vld [vmem:[#allocation7 + $0x38] sm:$0xff]
    %v223 = vld [vmem:[#allocation7 + $0x40] sm:$0xff]
    %v224 = vld [vmem:[#allocation7 + $0x48] sm:$0xff]
    %v225 = vld [vmem:[#allocation7 + $0x50] sm:$0xff]
    %v226 = vld [vmem:[#allocation7 + $0x58] sm:$0xff]
    %v227 = vld [vmem:[#allocation7 + $0x60] sm:$0xff]
    %v228 = vld [vmem:[#allocation7 + $0x68] sm:$0xff]
    %v229 = vld [vmem:[#allocation7 + $0x70] sm:$0xff]
    %v230 = vld [vmem:[#allocation7 + $0x78] sm:$0xff]
    %v231 = vld [vmem:[%s4] sm:$0x1]
    %v233 = vlaneseq
    %v234 = vshrl.u32 %v233, 7
    %v235 = vsub.s32 0, %v234
    %v236 = vrot.slane %v231, %v235
    %238 = vmatprep.subr.mxu0 0.0
    %239 = vmatpush1.msra.mxu0 %v215
    %240 = vmatprep.subr.mxu0 0.0
    %241 = vmatpush1.msra.mxu0 %v216
    %242 = vmatprep.subr.mxu0 0.0
    %243 = vmatpush1.msra.mxu0 %v217
    %244 = vmatprep.subr.mxu0 0.0
    %245 = vmatpush1.msra.mxu0 %v218
    %246 = vmatprep.subr.mxu0 0.0
    %247 = vmatpush1.msra.mxu0 %v219
    %248 = vmatprep.subr.mxu0 0.0
    %249 = vmatpush1.msra.mxu0 %v220
    %250 = vmatprep.subr.mxu0 0.0
    %251 = vmatpush1.msra.mxu0 %v221
    %252 = vmatprep.subr.mxu0 0.0
    %253 = vmatpush1.msra.mxu0 %v222
    %254 = vmatprep.subr.mxu0 0.0
    %255 = vmatpush1.msra.mxu0 %v223
    %256 = vmatprep.subr.mxu0 0.0
    %257 = vmatpush1.msra.mxu0 %v224
    %258 = vmatprep.subr.mxu0 0.0
    %259 = vmatpush1.msra.mxu0 %v225
    %260 = vmatprep.subr.mxu0 0.0
    %261 = vmatpush1.msra.mxu0 %v226
    %262 = vmatprep.subr.mxu0 0.0
    %263 = vmatpush1.msra.mxu0 %v227
    %264 = vmatprep.subr.mxu0 0.0
    %265 = vmatpush1.msra.mxu0 %v228
    %266 = vmatprep.subr.mxu0 0.0
    %267 = vmatpush1.msra.mxu0 %v229
    %268 = vmatprep.subr.mxu0 0.0
    %269 = vmatpush1.msra.mxu0 %v230
    %270 = vmatprep.subr.mxu0 0.0
    %271 = vmatpush1.msra.mxu0 0.0
    %272 = vmatprep.subr.mxu0 0.0
    %273 = vmatpush1.msra.mxu0 0.0
    %274 = vmatprep.subr.mxu0 0.0
    %275 = vmatpush1.msra.mxu0 0.0
    %276 = vmatprep.subr.mxu0 0.0
    %277 = vmatpush1.msra.mxu0 0.0
    %278 = vmatprep.subr.mxu0 0.0
    %279 = vmatpush1.msra.mxu0 0.0
    %280 = vmatprep.subr.mxu0 0.0
    %281 = vmatpush1.msra.mxu0 0.0
    %282 = vmatprep.subr.mxu0 0.0
    %283 = vmatpush1.msra.mxu0 0.0
    %284 = vmatprep.subr.mxu0 0.0
    %285 = vmatpush1.msra.mxu0 0.0
    %286 = vmatprep.subr.mxu0 0.0
    %287 = vmatpush1.msra.mxu0 0.0
    %288 = vmatprep.subr.mxu0 0.0
    %289 = vmatpush1.msra.mxu0 0.0
    %290 = vmatprep.subr.mxu0 0.0
    %291 = vmatpush1.msra.mxu0 0.0
    %292 = vmatprep.subr.mxu0 0.0
    %293 = vmatpush1.msra.mxu0 0.0
    %294 = vmatprep.subr.mxu0 0.0
    %295 = vmatpush1.msra.mxu0 0.0
    %296 = vmatprep.subr.mxu0 0.0
    %297 = vmatpush1.msra.mxu0 0.0
    %298 = vmatprep.subr.mxu0 0.0
    %299 = vmatpush1.msra.mxu0 0.0
    %300 = vmatprep.subr.mxu0 0.0
    %301 = vmatpush1.msra.mxu0 0.0
    %302 = vmatprep.mubr.f32.mxu0 0.0
    %303 = vmatmul.mubr.f32.gmra.mrb[0].mxu0 %v213
    %v304 = vpop.f32.mrb[0].mxu0
    %v305 = vadd.f32 %v236, %v304
    %v306 = vpop.f32.mrb[0].mxu0
    %307 = vmatprep.mubr.f32.mxu0 0.0
    %308 = vmatmul.mubr.f32.gmra.mrb[0].mxu0 %v214
    %v309 = vpop.f32.mrb[0].mxu0
    %v310 = vadd.f32 %v236, %v309
    %v311 = vpop.f32.mrb[0].mxu0
    %312 = vdwg.mxu0
    %313 = vst [vmem:[#allocation8] sm:$0xff] %v305
    %314 = vst [vmem:[#allocation8 + $0x8] sm:$0xff] %v310
    // Predicated region
    $region34: #{tpu_custom_call.1} parent=1 // pred_check
      _
    $region35: #{tpu_custom_call.1} parent=1 // pred_check_branch
      %316 = sbr.rel (0) target = $region37
    $region36: #{tpu_custom_call.1} parent=1 // pred_region
      %s318 = ssub.s32 256, 256
      %319 = vsyncadd [#allocation4], %s318
      %s320 = sshll.u32 [#allocation8], 4
      %s321 = int_to_ptr.vmem [resolvable:$true] %s320
      %326 = dma.vmem_to_hbm [thread:$0]  %s321, 256, %s5, [#allocation4], 128, 128, 8
    $region37: #{tpu_custom_call.1} parent=1 // pred_fallthru
      _
    // Predicated region
    $region38: #{tpu_custom_call.1} parent=1 // pred_check
      _
    $region39: #{tpu_custom_call.1} parent=1 // pred_check_branch
      %328 = sbr.rel (0) target = $region41
    $region40: #{tpu_custom_call.1} parent=1 // pred_region
      %329 = dma.done [#allocation4], 256
    $region41: #{tpu_custom_call.1} parent=1 // pred_fallthru
      _
    %330 = vsyncpa [#allocation3], 1
    %331 = vsyncpa [#allocation6], 1
    %332 = vsyncpa [#allocation4], 1

</llo_original>
